<compile_context>
chip_gen: v6e
topology: v6e:2x2x1
jax: 0.10.0
libtpu: 0.0.40
codegen_flags: <defaults>
</compile_context>

<pallas_src>
import jax
import jax.numpy as jnp
from jax.experimental import pallas as pl
from jax.experimental.pallas import tpu as pltpu

_INV_SQRT2 = 0.7071067811865476
_LN_EPS = 1e-5


def _round_up(x: int, m: int) -> int:
    return ((x + m - 1) // m) * m


def _state_classifier_kernel(x_ref, w1_ref, b1_ref, g_ref, beta_ref,
                             w2_ref, b2_ref, o_ref):
    # x_ref: (TB, S, D) f32 tile of the batch.
    x = x_ref[...]

    # Sequence reduction in f32. The 1/S of the mean is pre-folded into W1.
    xs = jnp.sum(x, axis=1)                                    # (TB, D) f32

    # dense1 on the MXU: bf16 inputs, f32 accumulation.
    h = jnp.dot(xs.astype(jnp.bfloat16), w1_ref[...],
                preferred_element_type=jnp.float32)
    h = h + b1_ref[...]                                        # (TB, D) f32

    # Exact GELU (PyTorch nn.GELU default, erf-based), f32 VPU/EUP math.
    h = 0.5 * h * (1.0 + jax.lax.erf(h * _INV_SQRT2))

    # LayerNorm over last dim, eps = 1e-5, affine, f32.
    mu = jnp.mean(h, axis=-1, keepdims=True)
    var = jnp.mean((h - mu) * (h - mu), axis=-1, keepdims=True)
    hn = (h - mu) * jax.lax.rsqrt(var + _LN_EPS)
    hn = hn * g_ref[...] + beta_ref[...]                       # (TB, D) f32

    # dense2 on the MXU: bf16 inputs, f32 accumulation. Output is lane-dense
    # (NP = multiple of 128); padded columns carry zero weights/bias.
    out = jnp.dot(hn.astype(jnp.bfloat16), w2_ref[...],
                  preferred_element_type=jnp.float32)
    o_ref[...] = (out + b2_ref[...]).astype(o_ref.dtype)       # (TB, NP)


@jax.jit
def state_classifier_forward(x, w1, b1, gamma, beta, w2, b2):
    """x: (B, S, D) f32. Weights in (in_features, out_features) layout.

    Returns logits (B, n_states) f32.
    """
    B, S, D = x.shape
    N = w2.shape[1]

    # Lane-dense output width (multiple of 128).
    NP = _round_up(max(N, 128), 128)

    # Batch tile: 128 MXU rows per grid step when B is large, otherwise the
    # smallest sublane-aligned tile that covers B.
    TB = 128 if B >= 128 else _round_up(max(B, 8), 8)
    B_pad = _round_up(B, TB)

    x_p = x if B_pad == B else jnp.pad(x, ((0, B_pad - B), (0, 0), (0, 0)))

    # One-time parameter prep: fold 1/S of the mean into W1, zero-pad W2/b2 to
    # the lane-dense width, cast weights to bf16 for the MXU path.
    w1s = (w1 * (1.0 / S)).astype(jnp.bfloat16)                    # (D, D) bf16
    w2p = jnp.pad(w2, ((0, 0), (0, NP - N))).astype(jnp.bfloat16)  # (D, NP) bf16
    b2p = jnp.pad(b2, ((0, 0), (0, NP - N)))                       # (1, NP) f32

    grid = (B_pad // TB,)

    cost = pl.CostEstimate(
        flops=2 * B_pad * D * D + 2 * B_pad * D * NP,
        transcendentals=B_pad * D,
        bytes_accessed=(4 * B_pad * S * D           # x
                        + 2 * D * D + 2 * D * NP    # bf16 weights
                        + 4 * (3 * D + NP)          # biases / gamma / beta
                        + 4 * B_pad * NP),          # output
    )

    out = pl.pallas_call(
        _state_classifier_kernel,
        out_shape=jax.ShapeDtypeStruct((B_pad, NP), jnp.float32),
        grid=grid,
        in_specs=[
            pl.BlockSpec((TB, S, D), lambda i: (i, 0, 0)),    # x (batch-tiled)
            pl.BlockSpec((D, D), lambda i: (0, 0)),           # W1/S, bf16
            pl.BlockSpec((1, D), lambda i: (0, 0)),           # b1
            pl.BlockSpec((1, D), lambda i: (0, 0)),           # gamma
            pl.BlockSpec((1, D), lambda i: (0, 0)),           # beta
            pl.BlockSpec((D, NP), lambda i: (0, 0)),          # W2 padded, bf16
            pl.BlockSpec((1, NP), lambda i: (0, 0)),          # b2 padded
        ],
        out_specs=pl.BlockSpec((TB, NP), lambda i: (i, 0)),
        compiler_params=pltpu.CompilerParams(
            dimension_semantics=("parallel",)),
        cost_estimate=cost,
    )(x_p, w1s, b1, gamma, beta, w2p, b2p)

    return out[:B, :N]


def _reference_forward_f32(x, w1, b1, gamma, beta, w2, b2):
    """Exact f32 reference matching the PyTorch module."""
    xm = jnp.mean(x, axis=1)
    h = xm @ w1 + b1[0]
    h = jax.nn.gelu(h, approximate=False)
    mu = jnp.mean(h, axis=-1, keepdims=True)
    var = jnp.mean((h - mu) ** 2, axis=-1, keepdims=True)
    hn = (h - mu) / jnp.sqrt(var + _LN_EPS)
    hn = hn * gamma[0] + beta[0]
    return hn @ w2 + b2[0]


def _reference_forward_bf16(x, w1, b1, gamma, beta, w2, b2):
    """Reference mimicking the kernel's bf16-on-MXU / f32-elementwise split."""
    S = x.shape[1]
    xs = jnp.sum(x, axis=1)
    w1s = (w1 * (1.0 / S)).astype(jnp.bfloat16)
    h = jnp.dot(xs.astype(jnp.bfloat16), w1s,
                preferred_element_type=jnp.float32) + b1[0]
    h = 0.5 * h * (1.0 + jax.lax.erf(h * _INV_SQRT2))
    mu = jnp.mean(h, axis=-1, keepdims=True)
    var = jnp.mean((h - mu) * (h - mu), axis=-1, keepdims=True)
    hn = (h - mu) * jax.lax.rsqrt(var + _LN_EPS)
    hn = hn * gamma[0] + beta[0]
    out = jnp.dot(hn.astype(jnp.bfloat16), w2.astype(jnp.bfloat16),
                  preferred_element_type=jnp.float32) + b2[0]
    return out


if __name__ == "__main__":
    # Small shapes implied by the module's forward: x is (batch, seq, d_model).
    B, S, D, N_STATES = 2, 8, 128, 8

    key = jax.random.PRNGKey(0)
    kx, kw1, kb1, kw2, kb2 = jax.random.split(key, 5)

    x = jax.random.normal(kx, (B, S, D), dtype=jnp.float32)

    # Deterministic parameter init (shapes match nn.Linear / nn.LayerNorm).
    # Weights stored as (in_features, out_features) for the kernel layout.
    w1 = jax.random.normal(kw1, (D, D), dtype=jnp.float32) * (1.0 / D ** 0.5)
    b1 = jax.random.normal(kb1, (1, D), dtype=jnp.float32) * 0.01
    gamma = jnp.ones((1, D), dtype=jnp.float32)      # LayerNorm default init
    beta = jnp.zeros((1, D), dtype=jnp.float32)
    w2 = jax.random.normal(kw2, (D, N_STATES), dtype=jnp.float32) * (1.0 / D ** 0.5)
    b2 = jax.random.normal(kb2, (1, N_STATES), dtype=jnp.float32) * 0.01

    out = state_classifier_forward(x, w1, b1, gamma, beta, w2, b2)
    out = jax.block_until_ready(out)
    assert out.shape == (B, N_STATES)

    # Tight check vs a reference using the same bf16-matmul / f32-elementwise
    # split as the kernel.
    ref_bf16 = _reference_forward_bf16(x, w1, b1, gamma, beta, w2, b2)
    assert jnp.allclose(out, ref_bf16, atol=1e-2, rtol=1e-2), \
        "mismatch vs bf16-matmul reference"

    # Loose sanity check vs the exact f32 PyTorch-equivalent reference
    # (tolerance sized for bf16 MXU inputs).
    ref_f32 = _reference_forward_f32(x, w1, b1, gamma, beta, w2, b2)
    assert jnp.allclose(out, ref_f32, atol=5e-2, rtol=5e-2), \
        "mismatch vs f32 reference"

    print("KERNEL_OK")
</pallas_src>

<mosaic_0001>
module attributes {stable_mosaic.version = 11 : i64} {
  func.func @_state_classifier_kernel(%arg0: i32, %arg1: memref<8x8x128xf32, #tpu.memory_space<vmem>>, %arg2: memref<128x128xbf16, #tpu.memory_space<vmem>>, %arg3: memref<1x128xf32, #tpu.memory_space<vmem>>, %arg4: memref<1x128xf32, #tpu.memory_space<vmem>>, %arg5: memref<1x128xf32, #tpu.memory_space<vmem>>, %arg6: memref<128x128xbf16, #tpu.memory_space<vmem>>, %arg7: memref<1x128xf32, #tpu.memory_space<vmem>>, %arg8: memref<8x128xf32, #tpu.memory_space<vmem>>) attributes {dimension_semantics = [#tpu.dimension_semantics<parallel>], iteration_bounds = array<i64: 1>, scalar_prefetch = 0 : i64, scratch_operands = 0 : i64, tpu.core_type = #tpu.core_type<tc>, window_params = [{transform_indices = @transform_0, window_bounds = array<i64: 8, 8, 128>}, {pipeline_mode = #tpu.pipeline_mode<synchronous>, transform_indices = @transform_1, window_bounds = array<i64: 128, 128>}, {pipeline_mode = #tpu.pipeline_mode<synchronous>, transform_indices = @transform_2, window_bounds = array<i64: 1, 128>}, {pipeline_mode = #tpu.pipeline_mode<synchronous>, transform_indices = @transform_3, window_bounds = array<i64: 1, 128>}, {pipeline_mode = #tpu.pipeline_mode<synchronous>, transform_indices = @transform_4, window_bounds = array<i64: 1, 128>}, {pipeline_mode = #tpu.pipeline_mode<synchronous>, transform_indices = @transform_5, window_bounds = array<i64: 128, 128>}, {pipeline_mode = #tpu.pipeline_mode<synchronous>, transform_indices = @transform_6, window_bounds = array<i64: 1, 128>}, {transform_indices = @transform_7, window_bounds = array<i64: 8, 128>}]} {
    %c0 = arith.constant 0 : index
    %c0_0 = arith.constant 0 : index
    %c0_1 = arith.constant 0 : index
    %0 = vector.load %arg1[%c0, %c0_0, %c0_1] : memref<8x8x128xf32, #tpu.memory_space<vmem>>, vector<8x8x128xf32>
    %cst = arith.constant dense<0.000000e+00> : vector<8x128xf32>
    %1 = vector.multi_reduction <add>, %0, %cst [1] : vector<8x8x128xf32> to vector<8x128xf32>
    %2 = arith.truncf %1 : vector<8x128xf32> to vector<8x128xbf16>
    %c0_2 = arith.constant 0 : index
    %c0_3 = arith.constant 0 : index
    %3 = vector.load %arg2[%c0_2, %c0_3] : memref<128x128xbf16, #tpu.memory_space<vmem>>, vector<128x128xbf16>
    %cst_4 = arith.constant dense<0.000000e+00> : vector<8x128xf32>
    %4 = tpu.matmul %2, %3, %cst_4 {dimension_numbers = #tpu.dot_dimension_numbers<[1], [0], [0], [1], [0, 0, 1, 1], [], []>} : vector<8x128xbf16>, vector<128x128xbf16>, vector<8x128xf32> -> vector<8x128xf32>
    %c0_5 = arith.constant 0 : index
    %c0_6 = arith.constant 0 : index
    %5 = vector.load %arg3[%c0_5, %c0_6] : memref<1x128xf32, #tpu.memory_space<vmem>>, vector<1x128xf32>
    %6 = vector.broadcast %5 : vector<1x128xf32> to vector<8x128xf32>
    %7 = arith.addf %4, %6 : vector<8x128xf32>
    %cst_7 = arith.constant 5.000000e-01 : f32
    %8 = vector.broadcast %cst_7 : f32 to vector<8x128xf32>
    %9 = arith.mulf %8, %7 : vector<8x128xf32>
    %cst_8 = arith.constant 0.707106769 : f32
    %10 = vector.broadcast %cst_8 : f32 to vector<8x128xf32>
    %11 = arith.mulf %7, %10 : vector<8x128xf32>
    %12 = math.erf %11 : vector<8x128xf32>
    %cst_9 = arith.constant 1.000000e+00 : f32
    %13 = vector.broadcast %cst_9 : f32 to vector<8x128xf32>
    %14 = arith.addf %13, %12 : vector<8x128xf32>
    %15 = arith.mulf %9, %14 : vector<8x128xf32>
    %cst_10 = arith.constant dense<0.000000e+00> : vector<8xf32>
    %16 = vector.multi_reduction <add>, %15, %cst_10 [1] : vector<8x128xf32> to vector<8xf32>
    %17 = vector.shape_cast %16 : vector<8xf32> to vector<8x1xf32>
    %cst_11 = arith.constant 1.280000e+02 : f32
    %18 = vector.broadcast %cst_11 : f32 to vector<8x1xf32>
    %19 = arith.divf %17, %18 : vector<8x1xf32>
    %20 = vector.broadcast %19 : vector<8x1xf32> to vector<8x128xf32>
    %21 = arith.subf %15, %20 : vector<8x128xf32>
    %22 = vector.broadcast %19 : vector<8x1xf32> to vector<8x128xf32>
    %23 = arith.subf %15, %22 : vector<8x128xf32>
    %24 = arith.mulf %21, %23 : vector<8x128xf32>
    %cst_12 = arith.constant dense<0.000000e+00> : vector<8xf32>
    %25 = vector.multi_reduction <add>, %24, %cst_12 [1] : vector<8x128xf32> to vector<8xf32>
    %26 = vector.shape_cast %25 : vector<8xf32> to vector<8x1xf32>
    %cst_13 = arith.constant 1.280000e+02 : f32
    %27 = vector.broadcast %cst_13 : f32 to vector<8x1xf32>
    %28 = arith.divf %26, %27 : vector<8x1xf32>
    %29 = vector.broadcast %19 : vector<8x1xf32> to vector<8x128xf32>
    %30 = arith.subf %15, %29 : vector<8x128xf32>
    %cst_14 = arith.constant 9.99999974E-6 : f32
    %31 = vector.broadcast %cst_14 : f32 to vector<8x1xf32>
    %32 = arith.addf %28, %31 : vector<8x1xf32>
    %33 = math.rsqrt %32 : vector<8x1xf32>
    %34 = vector.broadcast %33 : vector<8x1xf32> to vector<8x128xf32>
    %35 = arith.mulf %30, %34 : vector<8x128xf32>
    %c0_15 = arith.constant 0 : index
    %c0_16 = arith.constant 0 : index
    %36 = vector.load %arg4[%c0_15, %c0_16] : memref<1x128xf32, #tpu.memory_space<vmem>>, vector<1x128xf32>
    %37 = vector.broadcast %36 : vector<1x128xf32> to vector<8x128xf32>
    %38 = arith.mulf %35, %37 : vector<8x128xf32>
    %c0_17 = arith.constant 0 : index
    %c0_18 = arith.constant 0 : index
    %39 = vector.load %arg5[%c0_17, %c0_18] : memref<1x128xf32, #tpu.memory_space<vmem>>, vector<1x128xf32>
    %40 = vector.broadcast %39 : vector<1x128xf32> to vector<8x128xf32>
    %41 = arith.addf %38, %40 : vector<8x128xf32>
    %42 = arith.truncf %41 : vector<8x128xf32> to vector<8x128xbf16>
    %c0_19 = arith.constant 0 : index
    %c0_20 = arith.constant 0 : index
    %43 = vector.load %arg6[%c0_19, %c0_20] : memref<128x128xbf16, #tpu.memory_space<vmem>>, vector<128x128xbf16>
    %cst_21 = arith.constant dense<0.000000e+00> : vector<8x128xf32>
    %44 = tpu.matmul %42, %43, %cst_21 {dimension_numbers = #tpu.dot_dimension_numbers<[1], [0], [0], [1], [0, 0, 1, 1], [], []>} : vector<8x128xbf16>, vector<128x128xbf16>, vector<8x128xf32> -> vector<8x128xf32>
    %c0_22 = arith.constant 0 : index
    %c0_23 = arith.constant 0 : index
    %45 = vector.load %arg7[%c0_22, %c0_23] : memref<1x128xf32, #tpu.memory_space<vmem>>, vector<1x128xf32>
    %46 = vector.broadcast %45 : vector<1x128xf32> to vector<8x128xf32>
    %47 = arith.addf %44, %46 : vector<8x128xf32>
    %c0_24 = arith.constant 0 : index
    %c0_25 = arith.constant 0 : index
    %48 = vector.load %arg8[%c0_24, %c0_25] : memref<8x128xf32, #tpu.memory_space<vmem>>, vector<8x128xf32>
    tpu.vector_store %arg8[%c0_24, %c0_25], %47 {strides = array<i32>} : memref<8x128xf32, #tpu.memory_space<vmem>>, vector<8x128xf32>,
    return
  }
  func.func @transform_0(%arg0: i32) -> (i32, i32, i32) {
    %c0_i32 = arith.constant 0 : i32
    %c0_i32_0 = arith.constant 0 : i32
    %c0_i32_1 = arith.constant 0 : i32
    return %arg0, %c0_i32, %c0_i32_0 : i32, i32, i32
  }
  func.func @transform_1(%arg0: i32) -> (i32, i32) {
    %c0_i32 = arith.constant 0 : i32
    %c0_i32_0 = arith.constant 0 : i32
    %c0_i32_1 = arith.constant 0 : i32
    return %c0_i32, %c0_i32_0 : i32, i32
  }
  func.func @transform_2(%arg0: i32) -> (i32, i32) {
    %c0_i32 = arith.constant 0 : i32
    %c0_i32_0 = arith.constant 0 : i32
    %c0_i32_1 = arith.constant 0 : i32
    return %c0_i32, %c0_i32_0 : i32, i32
  }
  func.func @transform_3(%arg0: i32) -> (i32, i32) {
    %c0_i32 = arith.constant 0 : i32
    %c0_i32_0 = arith.constant 0 : i32
    %c0_i32_1 = arith.constant 0 : i32
    return %c0_i32, %c0_i32_0 : i32, i32
  }
  func.func @transform_4(%arg0: i32) -> (i32, i32) {
    %c0_i32 = arith.constant 0 : i32
    %c0_i32_0 = arith.constant 0 : i32
    %c0_i32_1 = arith.constant 0 : i32
    return %c0_i32, %c0_i32_0 : i32, i32
  }
  func.func @transform_5(%arg0: i32) -> (i32, i32) {
    %c0_i32 = arith.constant 0 : i32
    %c0_i32_0 = arith.constant 0 : i32
    %c0_i32_1 = arith.constant 0 : i32
    return %c0_i32, %c0_i32_0 : i32, i32
  }
  func.func @transform_6(%arg0: i32) -> (i32, i32) {
    %c0_i32 = arith.constant 0 : i32
    %c0_i32_0 = arith.constant 0 : i32
    %c0_i32_1 = arith.constant 0 : i32
    return %c0_i32, %c0_i32_0 : i32, i32
  }
  func.func @transform_7(%arg0: i32) -> (i32, i32) {
    %c0_i32 = arith.constant 0 : i32
    %c0_i32_0 = arith.constant 0 : i32
    return %arg0, %c0_i32 : i32, i32
  }
}

</mosaic_0001>

<llo_original>
// kernel: state_classifier_forward.1
$region0: #{state_classifier_forward.1}
  #allocation0 [shape = 'u32[]', space=smem, size = 0x4, offset = 0x4, fixed_abs, tag = 'smem constant byte address 0x4 - core index']
  #allocation1 [shape = 'u32[144,128]{1,0:T(1,128)}', space=vmem, size = 0x12000, scoped, tag = 'internal scratch']
  %s0 = inlined_call_operand.vmem [shape: f32[8,8,128], index: 0, kind: input, shape index: {}]
  %s1 = inlined_call_operand.vmem [shape: bf16[128,128], index: 1, kind: input, shape index: {}]
  %s2 = inlined_call_operand.vmem [shape: f32[1,128], index: 2, kind: input, shape index: {}]
  %s3 = inlined_call_operand.vmem [shape: f32[1,128], index: 3, kind: input, shape index: {}]
  %s4 = inlined_call_operand.vmem [shape: f32[1,128], index: 4, kind: input, shape index: {}]
  %s5 = inlined_call_operand.vmem [shape: bf16[128,128], index: 5, kind: input, shape index: {}]
  %s6 = inlined_call_operand.vmem [shape: f32[1,128], index: 6, kind: input, shape index: {}]
  %s7 = inlined_call_operand.vmem [shape: f32[8,128], index: 7, kind: output, shape index: {}]
  %s8 = sld [smem:[#allocation0]]
  $region38: #{state_classifier_forward.1} parent=0
    _
  %s10 = ssub.s32 1, %s8
  %s11 = scalar_select 0, %s10, %s8
  // Predicated region
  $region2: #{state_classifier_forward.1} parent=0 // pred_check
    _
  $region3: #{state_classifier_forward.1} parent=0 // pred_check_branch
    %13 = sbr.rel (0) target = $region5
  $region4: #{state_classifier_forward.1} parent=0 // pred_region
    _
  $region5: #{state_classifier_forward.1} parent=0 // pred_fallthru
    _
  // Predicated region
  $region6: #{state_classifier_forward.1} parent=0 // pred_check
    _
  $region7: #{state_classifier_forward.1} parent=0 // pred_check_branch
    %15 = sbr.rel (0) target = $region9
  $region8: #{state_classifier_forward.1} parent=0 // pred_region
    _
  $region9: #{state_classifier_forward.1} parent=0 // pred_fallthru
    _
  // Predicated region
  $region10: #{state_classifier_forward.1} parent=0 // pred_check
    _
  $region11: #{state_classifier_forward.1} parent=0 // pred_check_branch
    %17 = sbr.rel (0) target = $region13
  $region12: #{state_classifier_forward.1} parent=0 // pred_region
    _
  $region13: #{state_classifier_forward.1} parent=0 // pred_fallthru
    _
  // Predicated region
  $region14: #{state_classifier_forward.1} parent=0 // pred_check
    _
  $region15: #{state_classifier_forward.1} parent=0 // pred_check_branch
    %19 = sbr.rel (0) target = $region17
  $region16: #{state_classifier_forward.1} parent=0 // pred_region
    _
  $region17: #{state_classifier_forward.1} parent=0 // pred_fallthru
    _
  // Predicated region
  $region18: #{state_classifier_forward.1} parent=0 // pred_check
    _
  $region19: #{state_classifier_forward.1} parent=0 // pred_check_branch
    %21 = sbr.rel (0) target = $region21
  $region20: #{state_classifier_forward.1} parent=0 // pred_region
    _
  $region21: #{state_classifier_forward.1} parent=0 // pred_fallthru
    _
  // Predicated region
  $region22: #{state_classifier_forward.1} parent=0 // pred_check
    _
  $region23: #{state_classifier_forward.1} parent=0 // pred_check_branch
    %23 = sbr.rel (0) target = $region25
  $region24: #{state_classifier_forward.1} parent=0 // pred_region
    _
  $region25: #{state_classifier_forward.1} parent=0 // pred_fallthru
    _
  // Predicated region
  $region26: #{state_classifier_forward.1} parent=0 // pred_check
    _
  $region27: #{state_classifier_forward.1} parent=0 // pred_check_branch
    %25 = sbr.rel (0) target = $region29
  $region28: #{state_classifier_forward.1} parent=0 // pred_region
    _
  $region29: #{state_classifier_forward.1} parent=0 // pred_fallthru
    _
  %v27 = vld [vmem:[%s0] sm:$0xff]
  %v28 = vld [vmem:[%s0 + $0x8] sm:$0xff]
  %v29 = vld [vmem:[%s0 + $0x10] sm:$0xff]
  %v30 = vld [vmem:[%s0 + $0x18] sm:$0xff]
  %v31 = vld [vmem:[%s0 + $0x20] sm:$0xff]
  %v32 = vld [vmem:[%s0 + $0x28] sm:$0xff]
  %v33 = vld [vmem:[%s0 + $0x30] sm:$0xff]
  %v34 = vld [vmem:[%s0 + $0x38] sm:$0xff]
  %v35 = vrot.slane %v27, 4
  %v36 = vadd.f32 %v27, %v35
  %v37 = vrot.slane %v36, 2
  %v38 = vadd.f32 %v36, %v37
  %v39 = vrot.slane %v38, 1
  %v40 = vadd.f32 %v38, %v39
  %v41 = vrot.slane %v28, 4
  %v42 = vadd.f32 %v28, %v41
  %v43 = vrot.slane %v42, 2
  %v44 = vadd.f32 %v42, %v43
  %v45 = vrot.slane %v44, 1
  %v46 = vadd.f32 %v44, %v45
  %v47 = vrot.slane %v29, 4
  %v48 = vadd.f32 %v29, %v47
  %v49 = vrot.slane %v48, 2
  %v50 = vadd.f32 %v48, %v49
  %v51 = vrot.slane %v50, 1
  %v52 = vadd.f32 %v50, %v51
  %v53 = vrot.slane %v30, 4
  %v54 = vadd.f32 %v30, %v53
  %v55 = vrot.slane %v54, 2
  %v56 = vadd.f32 %v54, %v55
  %v57 = vrot.slane %v56, 1
  %v58 = vadd.f32 %v56, %v57
  %v59 = vrot.slane %v31, 4
  %v60 = vadd.f32 %v31, %v59
  %v61 = vrot.slane %v60, 2
  %v62 = vadd.f32 %v60, %v61
  %v63 = vrot.slane %v62, 1
  %v64 = vadd.f32 %v62, %v63
  %v65 = vrot.slane %v32, 4
  %v66 = vadd.f32 %v32, %v65
  %v67 = vrot.slane %v66, 2
  %v68 = vadd.f32 %v66, %v67
  %v69 = vrot.slane %v68, 1
  %v70 = vadd.f32 %v68, %v69
  %v71 = vrot.slane %v33, 4
  %v72 = vadd.f32 %v33, %v71
  %v73 = vrot.slane %v72, 2
  %v74 = vadd.f32 %v72, %v73
  %v75 = vrot.slane %v74, 1
  %v76 = vadd.f32 %v74, %v75
  %v77 = vrot.slane %v34, 4
  %v78 = vadd.f32 %v34, %v77
  %v79 = vrot.slane %v78, 2
  %v80 = vadd.f32 %v78, %v79
  %v81 = vrot.slane %v80, 1
  %v82 = vadd.f32 %v80, %v81
  %v83 = vpack.c.bf16 %v40, %v40
  %v84 = vpack.c.bf16 %v46, %v46
  %v85 = vpack.c.bf16 %v52, %v52
  %v86 = vpack.c.bf16 %v58, %v58
  %v87 = vpack.c.bf16 %v64, %v64
  %v88 = vpack.c.bf16 %v70, %v70
  %v89 = vpack.c.bf16 %v76, %v76
  %v90 = vpack.c.bf16 %v82, %v82
  %v91 = vld [vmem:[%s1] sm:$0xf]
  %v92 = vld [vmem:[%s1 + $0x4] sm:$0xf]
  %v93 = vld [vmem:[%s1 + $0x8] sm:$0xf]
  %v94 = vld [vmem:[%s1 + $0xc] sm:$0xf]
  %v95 = vld [vmem:[%s1 + $0x10] sm:$0xf]
  %v96 = vld [vmem:[%s1 + $0x14] sm:$0xf]
  %v97 = vld [vmem:[%s1 + $0x18] sm:$0xf]
  %v98 = vld [vmem:[%s1 + $0x1c] sm:$0xf]
  %v99 = vld [vmem:[%s1 + $0x20] sm:$0xf]
  %v100 = vld [vmem:[%s1 + $0x24] sm:$0xf]
  %v101 = vld [vmem:[%s1 + $0x28] sm:$0xf]
  %v102 = vld [vmem:[%s1 + $0x2c] sm:$0xf]
  %v103 = vld [vmem:[%s1 + $0x30] sm:$0xf]
  %v104 = vld [vmem:[%s1 + $0x34] sm:$0xf]
  %v105 = vld [vmem:[%s1 + $0x38] sm:$0xf]
  %v106 = vld [vmem:[%s1 + $0x3c] sm:$0xf]
  %v107 = vld [vmem:[%s2] sm:$0x1]
  %v109 = vlaneseq
  %v110 = vshrl.u32 %v109, 7
  %v111 = vsub.s32 0, %v110
  %v112 = vrot.slane %v107, %v111
  %v122 = vunpack.c.l.b16 %v83
  %v123 = vunpack.c.l.b16 %v84
  %v124 = vunpack.c.l.b16 %v85
  %v125 = vunpack.c.l.b16 %v86
  %v126 = vunpack.c.l.b16 %v87
  %v127 = vunpack.c.l.b16 %v88
  %v128 = vunpack.c.l.b16 %v89
  %v129 = vunpack.c.l.b16 %v90
  %vm130 = vcmask 1041409
  %v131 = vsel %vm130, %v123, %v122
  %vm132 = vcmask 1042434
  %v133 = vsel %vm132, %v124, %v131
  %vm134 = vcmask 1043459
  %v135 = vsel %vm134, %v125, %v133
  %vm136 = vcmask 1044484
  %v137 = vsel %vm136, %v126, %v135
  %vm138 = vcmask 1045509
  %v139 = vsel %vm138, %v127, %v137
  %vm140 = vcmask 1046534
  %v141 = vsel %vm140, %v128, %v139
  %vm142 = vcmask 1047559
  %v143 = vsel %vm142, %v129, %v141
  %v144 = vpack.c.b16 %v143, %v143
  %v162 = vunpack.c.l.b16 %v91
  %v163 = vunpack.c.l.b16 %v92
  %v164 = vunpack.c.l.b16 %v93
  %v165 = vunpack.c.l.b16 %v94
  %v166 = vunpack.c.l.b16 %v95
  %v167 = vunpack.c.l.b16 %v96
  %v168 = vunpack.c.l.b16 %v97
  %v169 = vunpack.c.l.b16 %v98
  %v170 = vunpack.c.l.b16 %v99
  %v171 = vunpack.c.l.b16 %v100
  %v172 = vunpack.c.l.b16 %v101
  %v173 = vunpack.c.l.b16 %v102
  %v174 = vunpack.c.l.b16 %v103
  %v175 = vunpack.c.l.b16 %v104
  %v176 = vunpack.c.l.b16 %v105
  %v177 = vunpack.c.l.b16 %v106
  %v178 = vpack.c.b16 %v163, %v162
  %v179 = vpack.c.b16 %v165, %v164
  %v180 = vpack.c.b16 %v167, %v166
  %v181 = vpack.c.b16 %v169, %v168
  %v182 = vpack.c.b16 %v171, %v170
  %v183 = vpack.c.b16 %v173, %v172
  %v184 = vpack.c.b16 %v175, %v174
  %v185 = vpack.c.b16 %v177, %v176
  %194 = vmatprep.subr.bf16.mxu0 0
  %195 = vmatpush1.bf16.msra.mxu0 %v185
  %196 = vmatprep.subr.bf16.mxu0 0
  %197 = vmatpush1.bf16.msra.mxu0 %v184
  %198 = vmatprep.subr.bf16.mxu0 0
  %199 = vmatpush1.bf16.msra.mxu0 %v183
  %200 = vmatprep.subr.bf16.mxu0 0
  %201 = vmatpush1.bf16.msra.mxu0 %v182
  %202 = vmatprep.subr.bf16.mxu0 0
  %203 = vmatpush1.bf16.msra.mxu0 %v181
  %204 = vmatprep.subr.bf16.mxu0 0
  %205 = vmatpush1.bf16.msra.mxu0 %v180
  %206 = vmatprep.subr.bf16.mxu0 0
  %207 = vmatpush1.bf16.msra.mxu0 %v179
  %208 = vmatprep.subr.bf16.mxu0 0
  %209 = vmatpush1.bf16.msra.mxu0 %v178
  %210 = vmatprep.subr.bf16.mxu0 0
  %211 = vmatpush2.bf16.msra.mxu0 0
  %212 = vmatprep.subr.bf16.mxu0 0
  %213 = vmatpush2.bf16.msra.mxu0 0
  %214 = vmatprep.subr.bf16.mxu0 0
  %215 = vmatpush2.bf16.msra.mxu0 0
  %216 = vmatprep.subr.bf16.mxu0 0
  %217 = vmatpush2.bf16.msra.mxu0 0
  %218 = vmatprep.subr.bf16.mxu0 0
  %219 = vmatpush2.bf16.msra.mxu0 0
  %220 = vmatprep.subr.bf16.mxu0 0
  %221 = vmatpush2.bf16.msra.mxu0 0
  %222 = vmatprep.subr.bf16.mxu0 0
  %223 = vmatpush2.bf16.msra.mxu0 0
  %224 = vmatprep.subr.bf16.mxu0 0
  %225 = vmatpush2.bf16.msra.mxu0 0
  %226 = vmatprep.mubr.bf16.mxu0 0
  %227 = vmatmul.mubr.bf16.gmra.mxu0 %v144
  %v228 = vpop.f32.mrf.mxu0
  %v229 = vadd.f32 %v112, %v228
  %v230 = vpop.f32.mrf.mxu0
  %v231 = vpop.f32.mrf.mxu0
  %v232 = vpop.f32.mrf.mxu0
  %233 = vdwg.mxu0
  %v234 = vmul.f32 %v229, 0.5
  %v235 = vmul.f32 %v229, 0.70710677
  %v236 = verf.f32.pop %v235
  %v237 = vadd.f32 %v236, 1.0
  %v238 = vmul.f32 %v234, %v237
  %239 = vadd.xlane.f32.xlu0 %v238
  %v240 = vpop.xlane.xlu0 %239
  %v241 = vrcp.pop 128.0
  %v242 = vmul.f32 %v240, %v241
  %v243 = vsub.f32 %v238, %v242
  %v244 = vmul.f32 %v243, %v243
  %245 = vadd.xlane.f32.xlu0 %v244
  %v246 = vpop.xlane.xlu0 %245
  %v247 = vmul.f32 %v246, %v241
  %v248 = vadd.f32 %v247, 1e-05
  %v249 = vrsqrt.pop %v248
  %v250 = vmul.f32 %v243, %v249
  %v251 = vld [vmem:[%s3] sm:$0x1]
  %v253 = vlaneseq
  %v254 = vshrl.u32 %v253, 7
  %v255 = vsub.s32 0, %v254
  %v256 = vrot.slane %v251, %v255
  %v258 = vmul.f32 %v250, %v256
  %v259 = vld [vmem:[%s4] sm:$0x1]
  %v261 = vlaneseq
  %v262 = vshrl.u32 %v261, 7
  %v263 = vsub.s32 0, %v262
  %v264 = vrot.slane %v259, %v263
  %v266 = vadd.f32 %v258, %v264
  %v267 = vpack.c.bf16 %v266, %v266
  %v268 = vld [vmem:[%s5] sm:$0xf]
  %v269 = vld [vmem:[%s5 + $0x4] sm:$0xf]
  %v270 = vld [vmem:[%s5 + $0x8] sm:$0xf]
  %v271 = vld [vmem:[%s5 + $0xc] sm:$0xf]
  %v272 = vld [vmem:[%s5 + $0x10] sm:$0xf]
  %v273 = vld [vmem:[%s5 + $0x14] sm:$0xf]
  %v274 = vld [vmem:[%s5 + $0x18] sm:$0xf]
  %v275 = vld [vmem:[%s5 + $0x1c] sm:$0xf]
  %v276 = vld [vmem:[%s5 + $0x20] sm:$0xf]
  %v277 = vld [vmem:[%s5 + $0x24] sm:$0xf]
  %v278 = vld [vmem:[%s5 + $0x28] sm:$0xf]
  %v279 = vld [vmem:[%s5 + $0x2c] sm:$0xf]
  %v280 = vld [vmem:[%s5 + $0x30] sm:$0xf]
  %v281 = vld [vmem:[%s5 + $0x34] sm:$0xf]
  %v282 = vld [vmem:[%s5 + $0x38] sm:$0xf]
  %v283 = vld [vmem:[%s5 + $0x3c] sm:$0xf]
  %v284 = vld [vmem:[%s6] sm:$0x1]
  %v286 = vlaneseq
  %v287 = vshrl.u32 %v286, 7
  %v288 = vsub.s32 0, %v287
  %v289 = vrot.slane %v284, %v288
  %v307 = vunpack.c.l.b16 %v268
  %v308 = vunpack.c.l.b16 %v269
  %v309 = vunpack.c.l.b16 %v270
  %v310 = vunpack.c.l.b16 %v271
  %v311 = vunpack.c.l.b16 %v272
  %v312 = vunpack.c.l.b16 %v273
  %v313 = vunpack.c.l.b16 %v274
  %v314 = vunpack.c.l.b16 %v275
  %v315 = vunpack.c.l.b16 %v276
  %v316 = vunpack.c.l.b16 %v277
  %v317 = vunpack.c.l.b16 %v278
  %v318 = vunpack.c.l.b16 %v279
  %v319 = vunpack.c.l.b16 %v280
  %v320 = vunpack.c.l.b16 %v281
  %v321 = vunpack.c.l.b16 %v282
  %v322 = vunpack.c.l.b16 %v283
  %v323 = vpack.c.b16 %v308, %v307
  %v324 = vpack.c.b16 %v310, %v309
  %v325 = vpack.c.b16 %v312, %v311
  %v326 = vpack.c.b16 %v314, %v313
  %v327 = vpack.c.b16 %v316, %v315
  %v328 = vpack.c.b16 %v318, %v317
  %v329 = vpack.c.b16 %v320, %v319
  %v330 = vpack.c.b16 %v322, %v321
  %339 = vmatprep.subr.bf16.mxu0 0
  %340 = vmatpush1.bf16.msra.mxu0 %v330
  %341 = vmatprep.subr.bf16.mxu0 0
  %342 = vmatpush1.bf16.msra.mxu0 %v329
  %343 = vmatprep.subr.bf16.mxu0 0
  %344 = vmatpush1.bf16.msra.mxu0 %v328
  %345 = vmatprep.subr.bf16.mxu0 0
  %346 = vmatpush1.bf16.msra.mxu0 %v327
  %347 = vmatprep.subr.bf16.mxu0 0
  %348 = vmatpush1.bf16.msra.mxu0 %v326
  %349 = vmatprep.subr.bf16.mxu0 0
  %350 = vmatpush1.bf16.msra.mxu0 %v325
  %351 = vmatprep.subr.bf16.mxu0 0
  %352 = vmatpush1.bf16.msra.mxu0 %v324
  %353 = vmatprep.subr.bf16.mxu0 0
  %354 = vmatpush1.bf16.msra.mxu0 %v323
  %355 = vmatprep.subr.bf16.mxu0 0
  %356 = vmatpush2.bf16.msra.mxu0 0
  %357 = vmatprep.subr.bf16.mxu0 0
  %358 = vmatpush2.bf16.msra.mxu0 0
  %359 = vmatprep.subr.bf16.mxu0 0
  %360 = vmatpush2.bf16.msra.mxu0 0
  %361 = vmatprep.subr.bf16.mxu0 0
  %362 = vmatpush2.bf16.msra.mxu0 0
  %363 = vmatprep.subr.bf16.mxu0 0
  %364 = vmatpush2.bf16.msra.mxu0 0
  %365 = vmatprep.subr.bf16.mxu0 0
  %366 = vmatpush2.bf16.msra.mxu0 0
  %367 = vmatprep.subr.bf16.mxu0 0
  %368 = vmatpush2.bf16.msra.mxu0 0
  %369 = vmatprep.subr.bf16.mxu0 0
  %370 = vmatpush2.bf16.msra.mxu0 0
  %371 = vmatprep.mubr.bf16.mxu0 0
  %372 = vmatmul.mubr.bf16.gmra.mxu0 %v267
  %v373 = vpop.f32.mrf.mxu0
  %v374 = vadd.f32 %v289, %v373
  %v375 = vpop.f32.mrf.mxu0
  %v376 = vpop.f32.mrf.mxu0
  %v377 = vpop.f32.mrf.mxu0
  %378 = vdwg.mxu0
  %379 = vst [vmem:[%s7] sm:$0xff] %v374
  // Predicated region
  $region30: #{state_classifier_forward.1} parent=0 // pred_check
    _
  $region31: #{state_classifier_forward.1} parent=0 // pred_check_branch
    %381 = sbr.rel (0) target = $region33
  $region32: #{state_classifier_forward.1} parent=0 // pred_region
    _
  $region33: #{state_classifier_forward.1} parent=0 // pred_fallthru
    _
  // Predicated region
  $region34: #{state_classifier_forward.1} parent=0 // pred_check
    _
  $region35: #{state_classifier_forward.1} parent=0 // pred_check_branch
    %383 = sbr.rel (0) target = $region37
  $region36: #{state_classifier_forward.1} parent=0 // pred_region
    _
  $region37: #{state_classifier_forward.1} parent=0 // pred_fallthru
    _

</llo_original>
